<compile_context>
chip_gen: v7x
topology: tpu7x:2x2x1
jax: 0.10.0
libtpu: 0.0.40
codegen_flags: <defaults>
</compile_context>

<pallas_src>
import functools

import jax
import jax.numpy as jnp
from jax.experimental import pallas as pl
from jax.experimental.pallas import tpu as pltpu

BN_EPS = 1e-5


def _round_up(v, m):
    return ((v + m - 1) // m) * m


# --------------------------------------------------------------------------------------
# Pass 1: Linear + bias + ReLU, write y, accumulate per-feature sum / sum-of-squares
# --------------------------------------------------------------------------------------
def linear_relu_stats_kernel(x_ref, w_ref, bias_ref, y_ref, stats_ref, *, true_b, tb):
    b_idx = pl.program_id(1)

    # stats block is resident across the (inner, "arbitrary") B axis -> init on first step.
    @pl.when(b_idx == 0)
    def _():
        stats_ref[...] = jnp.zeros_like(stats_ref)

    # MXU matmul with f32 accumulation; weight was pre-transposed to (Cin, TN) in the wrapper.
    y = jnp.dot(x_ref[...], w_ref[...], preferred_element_type=jnp.float32)
    y = y + bias_ref[...].astype(jnp.float32)     # + bias (broadcast (1, TN))
    y = jnp.maximum(y, 0.0)                       # ReLU

    # Mask padded batch rows (only emitted when padding exists) so BN moments use the true B.
    if true_b % tb != 0:
        rows = b_idx * tb + jax.lax.broadcasted_iota(jnp.int32, (tb, 1), 0)
        y = jnp.where(rows < true_b, y, 0.0)

    # One-pass moments (f32): rows = [sum(y), sum(y*y)] per feature.
    part = jnp.concatenate(
        [jnp.sum(y, axis=0, keepdims=True),
         jnp.sum(y * y, axis=0, keepdims=True)], axis=0)          # (2, TN)
    stats_ref[...] += part

    y_ref[...] = y.astype(y_ref.dtype)


# --------------------------------------------------------------------------------------
# Pass 2: fused BN affine epilogue  out = y * scale + shift
# --------------------------------------------------------------------------------------
def affine_kernel(y_ref, ss_ref, o_ref):
    ss = ss_ref[...].astype(jnp.float32)          # (2, TN): rows = scale, shift
    y = y_ref[...].astype(jnp.float32)
    o_ref[...] = (y * ss[0:1, :] + ss[1:2, :]).astype(o_ref.dtype)


# --------------------------------------------------------------------------------------
# Wrapper
# --------------------------------------------------------------------------------------
def nonlinear_forward(x, weight, bias, gamma, beta, *, compute_dtype=None, out_dtype=None):
    """x: (B, Cin); weight: (Cout, Cin) (PyTorch layout); bias/gamma/beta: (Cout,).

    compute_dtype: optionally jnp.bfloat16 for the two big operands (x, W) and the
    intermediate y (f32 MXU accumulation + f32 BN math preserved).
    out_dtype: output dtype (defaults to x.dtype).
    """
    B, Cin = x.shape
    Cout = weight.shape[0]
    out_dtype = x.dtype if out_dtype is None else out_dtype
    in_dtype = x.dtype if compute_dtype is None else compute_dtype
    y_dtype = in_dtype                               # intermediate activation dtype

    # ---- pad Cout to a lane-dense multiple of 128 (unmasked stores, full vregs) ----
    Cout_pad = _round_up(Cout, 128)
    cpad = Cout_pad - Cout
    if cpad:
        weight = jnp.pad(weight, ((0, cpad), (0, 0)))
        bias = jnp.pad(bias, (0, cpad))
        gamma = jnp.pad(gamma, (0, cpad), constant_values=1.0)
        beta = jnp.pad(beta, (0, cpad))

    # Transpose the (small) weight once in the wrapper -> plain sublane contraction in-kernel.
    w_t = weight.T.astype(in_dtype)                  # (Cin, Cout_pad)
    bias2d = bias.reshape(1, Cout_pad).astype(jnp.float32)
    x_in = x.astype(in_dtype)

    # ---- byte-budget-driven tile selection (fits v7x's 64 MiB VMEM with headroom) ----
    in_bytes = jnp.dtype(in_dtype).itemsize
    y_bytes = jnp.dtype(y_dtype).itemsize
    out_bytes = jnp.dtype(out_dtype).itemsize
    VMEM_BUDGET = 40 * 1024 * 1024

    B8 = _round_up(B, 8)
    tb_cands = [c for c in (1024, 512, 256, 128, 64, 32, 16, 8) if c <= B8] or [B8]

    TN, TB = 128, tb_cands[-1]
    found = False
    for tn in (512, 256, 128):                       # prefer 256-wide MXU occupancy (v6e/v7x)
        if Cout_pad % tn:
            continue
        for tb in tb_cands:
            vmem = (2 * tb * Cin * in_bytes          # x tile (double buffered)
                    + 2 * Cin * tn * in_bytes        # w^T tile
                    + 2 * tb * tn * y_bytes          # y output tile
                    + 2 * tb * tn * 4                # f32 epilogue temporaries
                    + 8 * tn * 4)                    # bias + stats tiles
            if vmem <= VMEM_BUDGET:
                TN, TB = tn, tb
                found = True
                break
        if found:
            break

    B_pad = _round_up(B, TB)
    bpad = B_pad - B
    if bpad:
        x_in = jnp.pad(x_in, ((0, bpad), (0, 0)))

    nj = Cout_pad // TN
    nb = B_pad // TB

    kernel1 = functools.partial(linear_relu_stats_kernel, true_b=B, tb=TB)

    # ---------------- Pass 1: Linear + ReLU + moments ----------------
    y_pad, stats = pl.pallas_call(
        kernel1,
        out_shape=(jax.ShapeDtypeStruct((B_pad, Cout_pad), y_dtype),
                   jax.ShapeDtypeStruct((2, Cout_pad), jnp.float32)),
        grid_spec=pltpu.PrefetchScalarGridSpec(
            num_scalar_prefetch=0,
            grid=(nj, nb),
            in_specs=[
                pl.BlockSpec((TB, Cin), lambda j, b: (b, 0)),    # x tile
                pl.BlockSpec((Cin, TN), lambda j, b: (0, j)),    # w^T tile
                pl.BlockSpec((1, TN), lambda j, b: (0, j)),      # bias tile
            ],
            out_specs=(
                pl.BlockSpec((TB, TN), lambda j, b: (b, j)),     # y tile
                pl.BlockSpec((2, TN), lambda j, b: (0, j)),      # moments accumulator
            ),
        ),
        compiler_params=pltpu.CompilerParams(
            dimension_semantics=("parallel", "arbitrary"),       # Cout parallel, B reduction
            vmem_limit_bytes=48 * 1024 * 1024,
        ),
        cost_estimate=pl.CostEstimate(
            flops=2 * B_pad * Cin * Cout_pad + 6 * B_pad * Cout_pad,
            transcendentals=0,
            bytes_accessed=(B_pad * Cin * in_bytes + Cin * Cout_pad * in_bytes
                            + B_pad * Cout_pad * y_bytes + 3 * Cout_pad * 4),
        ),
    )(x_in, w_t, bias2d)

    # ---- per-feature scale/shift from the accumulated moments (tiny f32 vectors) ----
    mean = stats[0] / B                                          # divide by TRUE batch size
    var = jnp.maximum(stats[1] / B - mean * mean, 0.0)           # one-pass biased variance
    scale = gamma.astype(jnp.float32) * jax.lax.rsqrt(var + BN_EPS)
    shift = beta.astype(jnp.float32) - mean * scale
    ss = jnp.stack([scale, shift], axis=0)                       # (2, Cout_pad)

    # ---------------- Pass 2: fused affine epilogue ----------------
    out_pad = pl.pallas_call(
        affine_kernel,
        out_shape=jax.ShapeDtypeStruct((B_pad, Cout_pad), out_dtype),
        grid_spec=pltpu.PrefetchScalarGridSpec(
            num_scalar_prefetch=0,
            grid=(nj, nb),
            in_specs=[
                pl.BlockSpec((TB, TN), lambda j, b: (b, j)),
                pl.BlockSpec((2, TN), lambda j, b: (0, j)),
            ],
            out_specs=pl.BlockSpec((TB, TN), lambda j, b: (b, j)),
        ),
        compiler_params=pltpu.CompilerParams(
            dimension_semantics=("parallel", "parallel"),
            vmem_limit_bytes=48 * 1024 * 1024,
        ),
        cost_estimate=pl.CostEstimate(
            flops=2 * B_pad * Cout_pad,
            transcendentals=0,
            bytes_accessed=B_pad * Cout_pad * (y_bytes + out_bytes) + 2 * Cout_pad * 4,
        ),
    )(y_pad, ss)

    out = out_pad
    if bpad:
        out = out[:B, :]
    if cpad:
        out = out[:, :Cout]
    return out


def reference_forward(x, weight, bias, gamma, beta):
    """Pure-JAX reference replicating PyTorch Linear->ReLU->BatchNorm1d (training mode)."""
    y = x @ weight.T + bias
    y = jnp.maximum(y, 0.0)
    mean = jnp.mean(y, axis=0, keepdims=True)
    var = jnp.mean((y - mean) ** 2, axis=0, keepdims=True)
    return (y - mean) / jnp.sqrt(var + BN_EPS) * gamma + beta


def _make_inputs(key, B, Cin, Cout):
    k_x, k_w, k_b = jax.random.split(key, 3)
    x = jax.random.normal(k_x, (B, Cin), dtype=jnp.float32)
    bound = 1.0 / (Cin ** 0.5)          # PyTorch Linear default init range
    weight = jax.random.uniform(k_w, (Cout, Cin), jnp.float32, -bound, bound)
    bias = jax.random.uniform(k_b, (Cout,), jnp.float32, -bound, bound)
    gamma = jnp.ones((Cout,), jnp.float32)    # BatchNorm1d weight init
    beta = jnp.zeros((Cout,), jnp.float32)    # BatchNorm1d bias init
    return x, weight, bias, gamma, beta


if __name__ == "__main__":
    key = jax.random.PRNGKey(0)
    k1, k2 = jax.random.split(key)

    # -- small shape: grid (1,1), no padding of B --
    B, Cin, Cout = 8, 16, 32
    x, weight, bias, gamma, beta = _make_inputs(k1, B, Cin, Cout)
    ref = reference_forward(x, weight, bias, gamma, beta)

    out = jax.block_until_ready(nonlinear_forward(x, weight, bias, gamma, beta))
    assert out.shape == (B, Cout)
    assert jnp.allclose(out, ref, atol=1e-3, rtol=1e-3), "f32 small-shape mismatch"

    # bf16 operand / intermediate path (f32 accumulation + f32 BN math preserved).
    out_bf16 = jax.block_until_ready(
        nonlinear_forward(x, weight, bias, gamma, beta, compute_dtype=jnp.bfloat16))
    assert out_bf16.shape == (B, Cout)
    assert jnp.allclose(out_bf16, ref, atol=1e-1, rtol=1e-1), "bf16 small-shape mismatch"

    # -- multi-tile shape: exercises B tiling + padded-row masking + Cout tiling --
    B2, Cin2, Cout2 = 300, 64, 300
    x2, w2, b2, g2, bt2 = _make_inputs(k2, B2, Cin2, Cout2)
    ref2 = reference_forward(x2, w2, b2, g2, bt2)

    out2 = jax.block_until_ready(nonlinear_forward(x2, w2, b2, g2, bt2))
    assert out2.shape == (B2, Cout2)
    assert jnp.allclose(out2, ref2, atol=1e-3, rtol=1e-3), "f32 multi-tile mismatch"

    print("KERNEL_OK")
</pallas_src>

<mosaic_0001>
module attributes {stable_mosaic.version = 11 : i64} {
  func.func @linear_relu_stats_kernel(%arg0: i32, %arg1: i32, %arg2: memref<8x16xf32, #tpu.memory_space<vmem>>, %arg3: memref<16x128xf32, #tpu.memory_space<vmem>>, %arg4: memref<1x128xf32, #tpu.memory_space<vmem>>, %arg5: memref<8x128xf32, #tpu.memory_space<vmem>>, %arg6: memref<2x128xf32, #tpu.memory_space<vmem>>) attributes {dimension_semantics = [#tpu.dimension_semantics<parallel>, #tpu.dimension_semantics<arbitrary>], iteration_bounds = array<i64: 1, 1>, scalar_prefetch = 0 : i64, scratch_operands = 0 : i64, tpu.core_type = #tpu.core_type<tc>, window_params = [{transform_indices = @transform_0, window_bounds = array<i64: 8, 16>}, {transform_indices = @transform_1, window_bounds = array<i64: 16, 128>}, {transform_indices = @transform_2, window_bounds = array<i64: 1, 128>}, {transform_indices = @transform_3, window_bounds = array<i64: 8, 128>}, {transform_indices = @transform_4, window_bounds = array<i64: 2, 128>}]} {
    %c0_i32 = arith.constant 0 : i32
    %0 = arith.cmpi eq, %arg1, %c0_i32 : i32
    %1 = arith.extui %0 : i1 to i32
    %c0_i32_0 = arith.constant 0 : i32
    %2 = arith.cmpi ne, %1, %c0_i32_0 : i32
    scf.if %2 {
      %cst_15 = arith.constant 0.000000e+00 : f32
      %21 = vector.broadcast %cst_15 : f32 to vector<2x128xf32>
      %c0_16 = arith.constant 0 : index
      %c0_17 = arith.constant 0 : index
      %22 = vector.load %arg6[%c0_16, %c0_17] : memref<2x128xf32, #tpu.memory_space<vmem>>, vector<2x128xf32>
      tpu.vector_store %arg6[%c0_16, %c0_17], %21 {strides = array<i32>} : memref<2x128xf32, #tpu.memory_space<vmem>>, vector<2x128xf32>,
    } else {
    }
    %c0 = arith.constant 0 : index
    %c0_1 = arith.constant 0 : index
    %3 = vector.load %arg2[%c0, %c0_1] : memref<8x16xf32, #tpu.memory_space<vmem>>, vector<8x16xf32>
    %c0_2 = arith.constant 0 : index
    %c0_3 = arith.constant 0 : index
    %4 = vector.load %arg3[%c0_2, %c0_3] : memref<16x128xf32, #tpu.memory_space<vmem>>, vector<16x128xf32>
    %cst = arith.constant dense<0.000000e+00> : vector<8x128xf32>
    %5 = tpu.matmul %3, %4, %cst {dimension_numbers = #tpu.dot_dimension_numbers<[1], [0], [0], [1], [0, 0, 1, 1], [], []>} : vector<8x16xf32>, vector<16x128xf32>, vector<8x128xf32> -> vector<8x128xf32>
    %c0_4 = arith.constant 0 : index
    %c0_5 = arith.constant 0 : index
    %6 = vector.load %arg4[%c0_4, %c0_5] : memref<1x128xf32, #tpu.memory_space<vmem>>, vector<1x128xf32>
    %7 = vector.broadcast %6 : vector<1x128xf32> to vector<8x128xf32>
    %8 = arith.addf %5, %7 : vector<8x128xf32>
    %cst_6 = arith.constant 0.000000e+00 : f32
    %9 = vector.broadcast %cst_6 : f32 to vector<8x128xf32>
    %10 = arith.maximumf %8, %9 : vector<8x128xf32>
    %cst_7 = arith.constant dense<0.000000e+00> : vector<128xf32>
    %11 = vector.multi_reduction <add>, %10, %cst_7 [0] : vector<8x128xf32> to vector<128xf32>
    %12 = vector.shape_cast %11 : vector<128xf32> to vector<1x128xf32>
    %13 = arith.mulf %10, %10 : vector<8x128xf32>
    %cst_8 = arith.constant dense<0.000000e+00> : vector<128xf32>
    %14 = vector.multi_reduction <add>, %13, %cst_8 [0] : vector<8x128xf32> to vector<128xf32>
    %15 = vector.shape_cast %14 : vector<128xf32> to vector<1x128xf32>
    %16 = tpu.concatenate %12, %15 in 0 : vector<1x128xf32>, vector<1x128xf32> -> vector<2x128xf32>
    %c0_9 = arith.constant 0 : index
    %c0_10 = arith.constant 0 : index
    %17 = vector.load %arg6[%c0_9, %c0_10] : memref<2x128xf32, #tpu.memory_space<vmem>>, vector<2x128xf32>
    %18 = arith.addf %17, %16 : vector<2x128xf32>
    %c0_11 = arith.constant 0 : index
    %c0_12 = arith.constant 0 : index
    %19 = vector.load %arg6[%c0_11, %c0_12] : memref<2x128xf32, #tpu.memory_space<vmem>>, vector<2x128xf32>
    tpu.vector_store %arg6[%c0_11, %c0_12], %18 {strides = array<i32>} : memref<2x128xf32, #tpu.memory_space<vmem>>, vector<2x128xf32>,
    %c0_13 = arith.constant 0 : index
    %c0_14 = arith.constant 0 : index
    %20 = vector.load %arg5[%c0_13, %c0_14] : memref<8x128xf32, #tpu.memory_space<vmem>>, vector<8x128xf32>
    tpu.vector_store %arg5[%c0_13, %c0_14], %10 {strides = array<i32>} : memref<8x128xf32, #tpu.memory_space<vmem>>, vector<8x128xf32>,
    return
  }
  func.func @transform_0(%arg0: i32, %arg1: i32) -> (i32, i32) {
    %c0_i32 = arith.constant 0 : i32
    %c0_i32_0 = arith.constant 0 : i32
    return %arg1, %c0_i32 : i32, i32
  }
  func.func @transform_1(%arg0: i32, %arg1: i32) -> (i32, i32) {
    %c0_i32 = arith.constant 0 : i32
    %c0_i32_0 = arith.constant 0 : i32
    return %c0_i32, %arg0 : i32, i32
  }
  func.func @transform_2(%arg0: i32, %arg1: i32) -> (i32, i32) {
    %c0_i32 = arith.constant 0 : i32
    %c0_i32_0 = arith.constant 0 : i32
    return %c0_i32, %arg0 : i32, i32
  }
  func.func @transform_3(%arg0: i32, %arg1: i32) -> (i32, i32) {
    %c0_i32 = arith.constant 0 : i32
    return %arg1, %arg0 : i32, i32
  }
  func.func @transform_4(%arg0: i32, %arg1: i32) -> (i32, i32) {
    %c0_i32 = arith.constant 0 : i32
    %c0_i32_0 = arith.constant 0 : i32
    return %c0_i32, %arg0 : i32, i32
  }
}

</mosaic_0001>

<llo_original>
// kernel: tpu_custom_call.1
$region0: #{tpu_custom_call.1}
  #allocation0 [shape = 'u32[]', space=smem, size = 0x4, offset = 0x4, fixed_abs, tag = 'smem constant byte address 0x4 - core index']
  #allocation1 [shape = 'u32[144,128]{1,0:T(1,128)}', space=vmem, size = 0x12000, scoped, tag = 'internal scratch']
  %s0 = inlined_call_operand.hbm [shape: f32[8,16], index: 0, kind: input, shape index: {}]
  %s1 = inlined_call_operand.hbm [shape: f32[16,128], index: 1, kind: input, shape index: {}]
  %s2 = inlined_call_operand.vmem [shape: f32[1,128], index: 2, kind: input, shape index: {}]
  %s3 = inlined_call_operand.hbm [shape: f32[8,128], index: 3, kind: output, shape index: {0}]
  %s4 = inlined_call_operand.hbm [shape: f32[2,128], index: 4, kind: output, shape index: {1}]
  %5 = xla_tuple %s3, %s4
  %s6 = sld [smem:[#allocation0]]
  $region42: #{tpu_custom_call.1} parent=0
    _
  %s8 = ssub.s32 1, %s6
  %s9 = scalar_select 0, %s8, %s6
  $region1: #{tpu_custom_call.1} parent=0
    #allocation2 [shape = 'u8[4096]{0}', space=vmem, size = 0x1000, scoped, tag = 'input window, operand 0, single buffered']
    #allocation3 [shape = 's32[1]{0}', space=sflag, size = 0x4, scoped, tag = 'scoped memory for tpu_custom_call.1']
    #allocation4 [shape = 's32[1]{0}', space=sflag, size = 0x4, scoped, tag = 'scoped memory for tpu_custom_call.1']
    #allocation5 [shape = 'u8[8192]{0}', space=vmem, size = 0x2000, scoped, tag = 'input window, operand 1, single buffered']
    #allocation6 [shape = 's32[1]{0}', space=sflag, size = 0x4, scoped, tag = 'scoped memory for tpu_custom_call.1']
    #allocation7 [shape = 'u8[4096]{0}', space=vmem, size = 0x1000, scoped, tag = 'output window, operand 0, single buffered']
    #allocation8 [shape = 'u8[1024]{0}', space=vmem, size = 0x400, scoped, tag = 'output window, operand 1, single buffered']
    #allocation9 [shape = 's32[1]{0}', space=sflag, size = 0x4, scoped, tag = 'scoped memory for tpu_custom_call.1']
    %10 = vsyncpa [#allocation3], 0
    %11 = vsyncpa [#allocation6], 0
    %12 = vsyncpa [#allocation4], 0
    %13 = vsyncpa [#allocation9], 0
    // Predicated region
    $region2: #{tpu_custom_call.1} parent=1 // pred_check
      _
    $region3: #{tpu_custom_call.1} parent=1 // pred_check_branch
      %15 = sbr.rel (0) target = $region5
    $region4: #{tpu_custom_call.1} parent=1 // pred_region
      %s17 = ssub.s32 128, 128
      %18 = vsyncadd [#allocation3], %s17
      %s20 = sshll.u32 [#allocation2], 4
      %s21 = int_to_ptr.vmem [resolvable:$true] %s20
      %23 = dma.hbm_to_vmem [thread:$0]  %s0, 128, %s21, [#allocation3]
    $region5: #{tpu_custom_call.1} parent=1 // pred_fallthru
      _
    // Predicated region
    $region6: #{tpu_custom_call.1} parent=1 // pred_check
      _
    $region7: #{tpu_custom_call.1} parent=1 // pred_check_branch
      %25 = sbr.rel (0) target = $region9
    $region8: #{tpu_custom_call.1} parent=1 // pred_region
      %s27 = ssub.s32 256, 256
      %28 = vsyncadd [#allocation6], %s27
      %s29 = sshll.u32 [#allocation5], 4
      %s30 = int_to_ptr.vmem [resolvable:$true] %s29
      %35 = dma.hbm_to_vmem [thread:$0]  %s1, 256, %s30, [#allocation6], 128, 128, 8
    $region9: #{tpu_custom_call.1} parent=1 // pred_fallthru
      _
    // Predicated region
    $region10: #{tpu_custom_call.1} parent=1 // pred_check
      _
    $region11: #{tpu_custom_call.1} parent=1 // pred_check_branch
      %37 = sbr.rel (0) target = $region13
    $region12: #{tpu_custom_call.1} parent=1 // pred_region
      _
    $region13: #{tpu_custom_call.1} parent=1 // pred_fallthru
      _
    // Predicated region
    $region14: #{tpu_custom_call.1} parent=1 // pred_check
      _
    $region15: #{tpu_custom_call.1} parent=1 // pred_check_branch
      %39 = sbr.rel (0) target = $region17
    $region16: #{tpu_custom_call.1} parent=1 // pred_region
      %40 = dma.done [#allocation3], 128
    $region17: #{tpu_custom_call.1} parent=1 // pred_fallthru
      _
    // Predicated region
    $region18: #{tpu_custom_call.1} parent=1 // pred_check
      _
    $region19: #{tpu_custom_call.1} parent=1 // pred_check_branch
      %42 = sbr.rel (0) target = $region21
    $region20: #{tpu_custom_call.1} parent=1 // pred_region
      %43 = dma.done [#allocation6], 256
    $region21: #{tpu_custom_call.1} parent=1 // pred_fallthru
      _
    %p44 = scmp.eq.s32.totalorder 0, 0
    // Predicated region
    $region22: #{tpu_custom_call.1} parent=1 // pred_check
      %p45 = pneg %p44
    $region23: #{tpu_custom_call.1} parent=1 // pred_check_branch
      %47 = sbr.rel (%p45) target = $region25
    $region24: #{tpu_custom_call.1} parent=1 // pred_region
      %48 = vst [vmem:[#allocation8] sm:$0x3] 0.0
    $region25: #{tpu_custom_call.1} parent=1 // pred_fallthru
      _
    %v49 = vld [vmem:[#allocation2] sm:$0xff]
    %v50 = vld [vmem:[#allocation5] sm:$0xff]
    %v51 = vld [vmem:[#allocation5 + $0x8] sm:$0xff]
    %v52 = vld [vmem:[%s2] sm:$0x1]
    %v54 = vlaneseq
    %v55 = vshrl.u32 %v54, 7
    %v56 = vsub.s32 0, %v55
    %v57 = vrot.slane %v52, %v56
    %vm59 = vcmask 130048
    %v61 = vsel %vm59, %v49, 0
    %63 = vmatprep.subr.mxu0 0.0
    %64 = vmatpush1.msra.mxu0 %v50
    %65 = vmatprep.subr.mxu0 0.0
    %66 = vmatpush1.msra.mxu0 %v51
    %67 = vmatprep.subr.mxu0 0.0
    %68 = vmatpush1.msra.mxu0 0.0
    %69 = vmatprep.subr.mxu0 0.0
    %70 = vmatpush1.msra.mxu0 0.0
    %71 = vmatprep.subr.mxu0 0.0
    %72 = vmatpush1.msra.mxu0 0.0
    %73 = vmatprep.subr.mxu0 0.0
    %74 = vmatpush1.msra.mxu0 0.0
    %75 = vmatprep.subr.mxu0 0.0
    %76 = vmatpush1.msra.mxu0 0.0
    %77 = vmatprep.subr.mxu0 0.0
    %78 = vmatpush1.msra.mxu0 0.0
    %79 = vmatprep.subr.mxu0 0.0
    %80 = vmatpush1.msra.mxu0 0.0
    %81 = vmatprep.subr.mxu0 0.0
    %82 = vmatpush1.msra.mxu0 0.0
    %83 = vmatprep.subr.mxu0 0.0
    %84 = vmatpush1.msra.mxu0 0.0
    %85 = vmatprep.subr.mxu0 0.0
    %86 = vmatpush1.msra.mxu0 0.0
    %87 = vmatprep.subr.mxu0 0.0
    %88 = vmatpush1.msra.mxu0 0.0
    %89 = vmatprep.subr.mxu0 0.0
    %90 = vmatpush1.msra.mxu0 0.0
    %91 = vmatprep.subr.mxu0 0.0
    %92 = vmatpush1.msra.mxu0 0.0
    %93 = vmatprep.subr.mxu0 0.0
    %94 = vmatpush1.msra.mxu0 0.0
    %95 = vmatprep.subr.mxu0 0.0
    %96 = vmatpush1.msra.mxu0 0.0
    %97 = vmatprep.subr.mxu0 0.0
    %98 = vmatpush1.msra.mxu0 0.0
    %99 = vmatprep.subr.mxu0 0.0
    %100 = vmatpush1.msra.mxu0 0.0
    %101 = vmatprep.subr.mxu0 0.0
    %102 = vmatpush1.msra.mxu0 0.0
    %103 = vmatprep.subr.mxu0 0.0
    %104 = vmatpush1.msra.mxu0 0.0
    %105 = vmatprep.subr.mxu0 0.0
    %106 = vmatpush1.msra.mxu0 0.0
    %107 = vmatprep.subr.mxu0 0.0
    %108 = vmatpush1.msra.mxu0 0.0
    %109 = vmatprep.subr.mxu0 0.0
    %110 = vmatpush1.msra.mxu0 0.0
    %111 = vmatprep.subr.mxu0 0.0
    %112 = vmatpush1.msra.mxu0 0.0
    %113 = vmatprep.subr.mxu0 0.0
    %114 = vmatpush1.msra.mxu0 0.0
    %115 = vmatprep.subr.mxu0 0.0
    %116 = vmatpush1.msra.mxu0 0.0
    %117 = vmatprep.subr.mxu0 0.0
    %118 = vmatpush1.msra.mxu0 0.0
    %119 = vmatprep.subr.mxu0 0.0
    %120 = vmatpush1.msra.mxu0 0.0
    %121 = vmatprep.subr.mxu0 0.0
    %122 = vmatpush1.msra.mxu0 0.0
    %123 = vmatprep.subr.mxu0 0.0
    %124 = vmatpush1.msra.mxu0 0.0
    %125 = vmatprep.subr.mxu0 0.0
    %126 = vmatpush1.msra.mxu0 0.0
    %127 = vmatprep.mubr.f32.mxu0 0.0
    %128 = vmatmul.mubr.f32.gmra.mrb[0].mxu0 %v61
    %v129 = vpop.f32.mrb[0].mxu0
    %v130 = vadd.f32 %v57, %v129
    %v131 = vpop.f32.mrb[0].mxu0
    %132 = vdwg.mxu0
    %v133 = vmax.f32 %v130, 0.0
    %v134 = vrot.slane %v133, 4
    %v135 = vadd.f32 %v133, %v134
    %v136 = vrot.slane %v135, 2
    %v137 = vadd.f32 %v135, %v136
    %v138 = vrot.slane %v137, 1
    %v139 = vadd.f32 %v137, %v138
    %v140 = vmul.f32 %v133, %v133
    %v141 = vrot.slane %v140, 4
    %v142 = vadd.f32 %v140, %v141
    %v143 = vrot.slane %v142, 2
    %v144 = vadd.f32 %v142, %v143
    %v145 = vrot.slane %v144, 1
    %v146 = vadd.f32 %v144, %v145
    %vm147 = vcmask 1040384
    %v148 = vsel %vm147, %v139, %v146
    %v149 = vld [vmem:[#allocation8] sm:$0x3]
    %v150 = vadd.f32 %v149, %v148
    %151 = vst [vmem:[#allocation8] sm:$0x3] %v150
    %152 = vst [vmem:[#allocation7] sm:$0xff] %v133
    // Predicated region
    $region26: #{tpu_custom_call.1} parent=1 // pred_check
      _
    $region27: #{tpu_custom_call.1} parent=1 // pred_check_branch
      %154 = sbr.rel (0) target = $region29
    $region28: #{tpu_custom_call.1} parent=1 // pred_region
      %s156 = ssub.s32 128, 128
      %157 = vsyncadd [#allocation4], %s156
      %s159 = sshll.u32 [#allocation7], 4
      %s160 = int_to_ptr.vmem [resolvable:$true] %s159
      %162 = dma.vmem_to_hbm [thread:$0]  %s160, 128, %s3, [#allocation4]
    $region29: #{tpu_custom_call.1} parent=1 // pred_fallthru
      _
    // Predicated region
    $region30: #{tpu_custom_call.1} parent=1 // pred_check
      _
    $region31: #{tpu_custom_call.1} parent=1 // pred_check_branch
      %164 = sbr.rel (0) target = $region33
    $region32: #{tpu_custom_call.1} parent=1 // pred_region
      %s166 = ssub.s32 32, 32
      %167 = vsyncadd [#allocation9], %s166
      %s169 = sshll.u32 [#allocation8], 4
      %s170 = int_to_ptr.vmem [resolvable:$true] %s169
      %172 = dma.vmem_to_hbm [thread:$0]  %s170, 32, %s4, [#allocation9]
    $region33: #{tpu_custom_call.1} parent=1 // pred_fallthru
      _
    // Predicated region
    $region34: #{tpu_custom_call.1} parent=1 // pred_check
      _
    $region35: #{tpu_custom_call.1} parent=1 // pred_check_branch
      %174 = sbr.rel (0) target = $region37
    $region36: #{tpu_custom_call.1} parent=1 // pred_region
      %175 = dma.done [#allocation4], 128
    $region37: #{tpu_custom_call.1} parent=1 // pred_fallthru
      _
    // Predicated region
    $region38: #{tpu_custom_call.1} parent=1 // pred_check
      _
    $region39: #{tpu_custom_call.1} parent=1 // pred_check_branch
      %177 = sbr.rel (0) target = $region41
    $region40: #{tpu_custom_call.1} parent=1 // pred_region
      %178 = dma.done [#allocation9], 32
    $region41: #{tpu_custom_call.1} parent=1 // pred_fallthru
      _
    %179 = vsyncpa [#allocation3], 1
    %180 = vsyncpa [#allocation6], 1
    %181 = vsyncpa [#allocation4], 1
    %182 = vsyncpa [#allocation9], 1

</llo_original>
